<compile_context>
chip_gen: v5e
topology: v5e:2x2
jax: 0.10.0
libtpu: 0.0.40
codegen_flags: <defaults>
</compile_context>

<pallas_src>
import functools

import jax
import jax.numpy as jnp
from jax.experimental import pallas as pl
from jax.experimental.pallas import tpu as pltpu


def _round_up(x, m):
    return ((x + m - 1) // m) * m


# ----------------------------------------------------------------------------
# Pallas kernel: one batch tile of the whole FCNet forward.
# Prepared-param layout (see prepare_fcnet_params): per layer one weight (in_p, out_p)
# in compute dtype and one bias (1, out_p) in f32.  `pack[i]` is the lane-pad half-width
# (ph) of layer i's packed output, or None for the final layer (no MaxMin after it).
# ----------------------------------------------------------------------------
def fcnet_kernel(x_ref, *refs, pack, compute_dtype):
    o_ref = refs[-1]
    p = refs[:-1]
    cd = compute_dtype

    h = x_ref[...]                       # producer dtype; cast per-dot below
    masks = {}                           # hoisted lane masks, one per packed width

    for i, ph in enumerate(pack):
        w = p[2 * i][...]
        b = p[2 * i + 1][...]
        # Single full-width dot per layer; f32 accumulate + f32 bias add.
        acc = jnp.dot(h.astype(cd), w, preferred_element_type=jnp.float32) + b

        if ph is None:                   # final layer: no MaxMin
            h = acc
        else:
            # MaxMin(grouping=2) on the packed [even | 0 | odd | 0] layout:
            # pair partners sit exactly `ph` lanes apart, so one roll + max/min + select
            # yields [maxes | 0 | mins | 0], which is exactly the row layout the next
            # layer's (row-packed) weight expects.  bf16 here is exact w.r.t. casting
            # after the max/min (monotone rounding) and halves vreg/VMEM traffic.
            hb = acc.astype(cd)
            r = pltpu.roll(hb, shift=ph, axis=1)
            if ph not in masks:          # emit the iota/compare once, reuse across layers
                lane = jax.lax.broadcasted_iota(jnp.int32, hb.shape, 1)
                masks[ph] = lane < ph
            h = jnp.where(masks[ph], jnp.maximum(hb, r), jnp.minimum(hb, r))

    o_ref[...] = h.astype(o_ref.dtype)


# ----------------------------------------------------------------------------
# One-time parameter preparation (hoisted out of the per-call forward path).
#   torch layout in `params`: [(W (out,in), b (out,)), ...]
#   - Scale factor folded exactly:  (factor*W) x + factor*b == factor*(W x + b).
#   - Weights transposed to (in, out).
#   - MaxMin-feeding layers: output columns permuted/padded to [pair-even|0|pair-odd|0]
#     with each half occupying `half` of `ph` lanes (ph = 64 for half<=64).
#   - MaxMin-consuming layers: input rows placed at [0,half) (maxes) and [ph, ph+half)
#     (mins) of the padded width, zeros elsewhere — matching the packed activation.
# ----------------------------------------------------------------------------
def prepare_fcnet_params(params, scale, compute_dtype=jnp.bfloat16):
    n_layers = len(params)
    assert n_layers >= 2
    flat = []
    pack = []
    prev_pack = None                     # (half, ph) of the previous layer's packed output
    for i, (w, b) in enumerate(params):
        w = jnp.asarray(w, jnp.float32) * scale          # fold Scale into W
        b = jnp.asarray(b, jnp.float32) * scale          # fold Scale into b
        wt = w.T                                          # (in, out)
        in_dim, out_dim = wt.shape
        feeds_maxmin = i < n_layers - 1

        # ---- pack rows to match the packed [maxes|0|mins|0] activation we produce ----
        if prev_pack is not None:
            half_p, ph_p = prev_pack
            assert in_dim == 2 * half_p
            rows = jnp.zeros((2 * ph_p, out_dim), jnp.float32)
            rows = rows.at[0:half_p].set(wt[0:half_p])            # rows hit by maxes
            rows = rows.at[ph_p:ph_p + half_p].set(wt[half_p:])   # rows hit by mins
            wt = rows

        # ---- pack output columns so the kernel MaxMin is roll(ph) + max/min + select ----
        if feeds_maxmin:
            assert out_dim % 2 == 0, "MaxMin(grouping=2) needs an even layer width"
            half = out_dim // 2
            ph = 64 if half <= 64 else _round_up(half, 128)       # clean native rotations
            cols = jnp.zeros((wt.shape[0], 2 * ph), jnp.float32)
            cols = cols.at[:, 0:half].set(wt[:, 0::2])            # pair members 2j
            cols = cols.at[:, ph:ph + half].set(wt[:, 1::2])      # pair members 2j+1
            bias = jnp.zeros((2 * ph,), jnp.float32)
            bias = bias.at[0:half].set(b[0::2]).at[ph:ph + half].set(b[1::2])
            wt, b = cols, bias
            prev_pack = (half, ph)
            pack.append(ph)
        else:
            prev_pack = None
            pack.append(None)

        flat.append(wt.astype(compute_dtype))
        flat.append(b[None, :].astype(jnp.float32))               # biases stay f32
    # TODO(synk): FCNet's groupings==1 branch (output-doubling MaxMin) is unused in the
    # standard config and is not emitted here.
    return tuple(flat), tuple(pack)


# ----------------------------------------------------------------------------
# Forward wrapper: batch tiling + pallas_call.
# ----------------------------------------------------------------------------
def fcnet_forward(x, prepared, pack, *, compute_dtype=jnp.bfloat16, tile_b=4096):
    input_dim = prepared[0].shape[0]
    out_dim = prepared[-1].shape[1]

    # x.view(-1, input_dim); NO dtype cast here (cast happens in-kernel after the DMA).
    x2d = x.reshape(-1, input_dim)
    b_rows = x2d.shape[0]

    # Equalized batch tiles: waste <=127 rows per tile; keep >=2 (even) grid steps for
    # batches >= 256 rows so both v7x TensorCores are used.
    n_tiles = pl.cdiv(b_rows, tile_b)
    if b_rows >= 256:
        n_tiles = max(n_tiles, 2)
        if n_tiles % 2:
            n_tiles += 1
    tile = _round_up(pl.cdiv(b_rows, n_tiles), 128)
    padded = n_tiles * tile
    if padded != b_rows:
        x2d = jnp.pad(x2d, ((0, padded - b_rows), (0, 0)))
    grid = (n_tiles,)

    in_specs = [pl.BlockSpec((tile, input_dim), lambda i: (i, 0))]
    # Weights/biases: full-array blocks with constant index_map -> resident in VMEM.
    in_specs += [pl.BlockSpec(p.shape, lambda i: (0, 0)) for p in prepared]
    out_specs = pl.BlockSpec((tile, out_dim), lambda i: (i, 0))

    weights = prepared[0::2]
    flops_per_row = sum(2 * w.shape[0] * w.shape[1] for w in weights)
    weight_bytes = sum(int(p.size) * p.dtype.itemsize for p in prepared)
    cost = pl.CostEstimate(
        flops=padded * flops_per_row,
        transcendentals=0,
        bytes_accessed=padded * (input_dim * x2d.dtype.itemsize + out_dim * 4)
        + weight_bytes,
    )

    kernel = functools.partial(fcnet_kernel, pack=pack, compute_dtype=compute_dtype)

    out = pl.pallas_call(
        kernel,
        grid=grid,
        out_shape=jax.ShapeDtypeStruct((padded, out_dim), jnp.float32),
        in_specs=in_specs,
        out_specs=out_specs,
        compiler_params=pltpu.CompilerParams(
            dimension_semantics=("parallel",),       # megacore sharding on v7x
            vmem_limit_bytes=32 * 1024 * 1024,       # within the v7x scoped default
        ),
        cost_estimate=cost,
    )(x2d, *prepared)
    return out[:b_rows]


# ----------------------------------------------------------------------------
# Deterministic init mimicking StandardLinear.reset_parameters (torch layout (out, in)).
# ----------------------------------------------------------------------------
def make_fcnet_params(key, layer_sizes):
    params = []
    for i in range(len(layer_sizes) - 1):
        fan_in, fan_out = layer_sizes[i], layer_sizes[i + 1]
        key, kw, kb = jax.random.split(key, 3)
        stdv = 1.0 / (fan_in ** 0.5)
        w = jax.nn.initializers.orthogonal(scale=stdv)(kw, (fan_out, fan_in), jnp.float32)
        b = jax.random.uniform(kb, (fan_out,), jnp.float32, minval=-stdv, maxval=stdv)
        params.append((w, b))
    return params


# ----------------------------------------------------------------------------
# Pure-JAX reference with exact torch FCNet semantics (Linear -> Scale -> MaxMin).
# ----------------------------------------------------------------------------
def fcnet_reference(x, params, input_dim, scale):
    h = x.reshape(-1, input_dim).astype(jnp.float32)
    n_layers = len(params)
    for i, (w, b) in enumerate(params):
        h = h @ w.T + b            # F.linear
        h = scale * h              # Scale
        if i < n_layers - 1:       # MaxMin(num_units = C // 2)
            bsz, c = h.shape
            g = h.reshape(bsz, c // 2, 2)
            h = jnp.concatenate([g.max(axis=-1), g.min(axis=-1)], axis=1)
    return h


if __name__ == "__main__":
    # FCNet(layers=[32, 32, 32, 8], input_dim=64, l_constant=4.0)
    input_dim = 64
    hidden_layers = [32, 32, 32, 8]
    l_constant = 4.0
    layer_sizes = [input_dim] + hidden_layers
    num_layers = len(layer_sizes)
    scale = float(l_constant ** (1.0 / (num_layers - 1)))   # Scale.factor per layer

    key = jax.random.PRNGKey(0)
    key_x, key_p = jax.random.split(key)

    # small deterministic input; forward flattens it to (2, 64)
    x = jax.random.normal(key_x, (2, 4, 16), dtype=jnp.float32)
    params = make_fcnet_params(key_p, layer_sizes)

    ref = jax.block_until_ready(fcnet_reference(x, params, input_dim, scale))

    # --- f32 MXU-operand path: tight check of the packing / permutation logic ---
    prep_f32, pack_f32 = prepare_fcnet_params(params, scale, compute_dtype=jnp.float32)
    out_f32 = jax.block_until_ready(
        fcnet_forward(x, prep_f32, pack_f32, compute_dtype=jnp.float32))
    assert out_f32.shape == (2, hidden_layers[-1])
    assert jnp.allclose(out_f32, ref, atol=1e-4, rtol=1e-3), "f32 mismatch vs reference"

    # --- bf16 MXU-operand path (default; recommended on v5e/v6e/v7x) ---
    prep_bf16, pack_bf16 = prepare_fcnet_params(params, scale)
    out_bf16 = jax.block_until_ready(fcnet_forward(x, prep_bf16, pack_bf16))
    assert out_bf16.shape == (2, hidden_layers[-1])
    assert jnp.allclose(out_bf16, ref, atol=3e-2, rtol=5e-2), "bf16 mismatch vs reference"

    print("KERNEL_OK")
</pallas_src>

<mosaic_0001>
module attributes {stable_mosaic.version = 11 : i64} {
  func.func @fcnet_kernel(%arg0: i32, %arg1: memref<128x64xf32, #tpu.memory_space<vmem>>, %arg2: memref<64x128xf32, #tpu.memory_space<vmem>>, %arg3: memref<1x128xf32, #tpu.memory_space<vmem>>, %arg4: memref<128x128xf32, #tpu.memory_space<vmem>>, %arg5: memref<1x128xf32, #tpu.memory_space<vmem>>, %arg6: memref<128x128xf32, #tpu.memory_space<vmem>>, %arg7: memref<1x128xf32, #tpu.memory_space<vmem>>, %arg8: memref<128x8xf32, #tpu.memory_space<vmem>>, %arg9: memref<1x8xf32, #tpu.memory_space<vmem>>, %arg10: memref<128x8xf32, #tpu.memory_space<vmem>>) attributes {dimension_semantics = [#tpu.dimension_semantics<parallel>], iteration_bounds = array<i64: 1>, scalar_prefetch = 0 : i64, scratch_operands = 0 : i64, tpu.core_type = #tpu.core_type<tc>, window_params = [{transform_indices = @transform_0, window_bounds = array<i64: 128, 64>}, {pipeline_mode = #tpu.pipeline_mode<synchronous>, transform_indices = @transform_1, window_bounds = array<i64: 64, 128>}, {pipeline_mode = #tpu.pipeline_mode<synchronous>, transform_indices = @transform_2, window_bounds = array<i64: 1, 128>}, {pipeline_mode = #tpu.pipeline_mode<synchronous>, transform_indices = @transform_3, window_bounds = array<i64: 128, 128>}, {pipeline_mode = #tpu.pipeline_mode<synchronous>, transform_indices = @transform_4, window_bounds = array<i64: 1, 128>}, {pipeline_mode = #tpu.pipeline_mode<synchronous>, transform_indices = @transform_5, window_bounds = array<i64: 128, 128>}, {pipeline_mode = #tpu.pipeline_mode<synchronous>, transform_indices = @transform_6, window_bounds = array<i64: 1, 128>}, {pipeline_mode = #tpu.pipeline_mode<synchronous>, transform_indices = @transform_7, window_bounds = array<i64: 128, 8>}, {pipeline_mode = #tpu.pipeline_mode<synchronous>, transform_indices = @transform_8, window_bounds = array<i64: 1, 8>}, {transform_indices = @transform_9, window_bounds = array<i64: 128, 8>}]} {
    %c0 = arith.constant 0 : index
    %c0_0 = arith.constant 0 : index
    %0 = vector.load %arg1[%c0, %c0_0] : memref<128x64xf32, #tpu.memory_space<vmem>>, vector<128x64xf32>
    %c0_1 = arith.constant 0 : index
    %c0_2 = arith.constant 0 : index
    %1 = vector.load %arg2[%c0_1, %c0_2] : memref<64x128xf32, #tpu.memory_space<vmem>>, vector<64x128xf32>
    %c0_3 = arith.constant 0 : index
    %c0_4 = arith.constant 0 : index
    %2 = vector.load %arg3[%c0_3, %c0_4] : memref<1x128xf32, #tpu.memory_space<vmem>>, vector<1x128xf32>
    %cst = arith.constant dense<0.000000e+00> : vector<128x128xf32>
    %3 = tpu.matmul %0, %1, %cst {dimension_numbers = #tpu.dot_dimension_numbers<[1], [0], [0], [1], [0, 0, 1, 1], [], []>} : vector<128x64xf32>, vector<64x128xf32>, vector<128x128xf32> -> vector<128x128xf32>
    %4 = vector.broadcast %2 : vector<1x128xf32> to vector<128x128xf32>
    %5 = arith.addf %3, %4 : vector<128x128xf32>
    %c64_i32 = arith.constant 64 : i32
    %6 = tpu.dynamic_rotate %5 by %c64_i32 dim 1 : vector<128x128xf32>, i32 -> vector<128x128xf32>
    %7 = tpu.iota {dimensions = array<i32: 1>} : vector<128x128xi32>
    %c64_i32_5 = arith.constant 64 : i32
    %8 = vector.broadcast %c64_i32_5 : i32 to vector<128x128xi32>
    %9 = arith.cmpi slt, %7, %8 : vector<128x128xi32>
    %10 = arith.maximumf %5, %6 : vector<128x128xf32>
    %11 = arith.minimumf %5, %6 : vector<128x128xf32>
    %12 = arith.select %9, %10, %11 : vector<128x128xi1>, vector<128x128xf32>
    %c0_6 = arith.constant 0 : index
    %c0_7 = arith.constant 0 : index
    %13 = vector.load %arg4[%c0_6, %c0_7] : memref<128x128xf32, #tpu.memory_space<vmem>>, vector<128x128xf32>
    %c0_8 = arith.constant 0 : index
    %c0_9 = arith.constant 0 : index
    %14 = vector.load %arg5[%c0_8, %c0_9] : memref<1x128xf32, #tpu.memory_space<vmem>>, vector<1x128xf32>
    %cst_10 = arith.constant dense<0.000000e+00> : vector<128x128xf32>
    %15 = tpu.matmul %12, %13, %cst_10 {dimension_numbers = #tpu.dot_dimension_numbers<[1], [0], [0], [1], [0, 0, 1, 1], [], []>} : vector<128x128xf32>, vector<128x128xf32>, vector<128x128xf32> -> vector<128x128xf32>
    %16 = vector.broadcast %14 : vector<1x128xf32> to vector<128x128xf32>
    %17 = arith.addf %15, %16 : vector<128x128xf32>
    %c64_i32_11 = arith.constant 64 : i32
    %18 = tpu.dynamic_rotate %17 by %c64_i32_11 dim 1 : vector<128x128xf32>, i32 -> vector<128x128xf32>
    %19 = arith.maximumf %17, %18 : vector<128x128xf32>
    %20 = arith.minimumf %17, %18 : vector<128x128xf32>
    %21 = arith.select %9, %19, %20 : vector<128x128xi1>, vector<128x128xf32>
    %c0_12 = arith.constant 0 : index
    %c0_13 = arith.constant 0 : index
    %22 = vector.load %arg6[%c0_12, %c0_13] : memref<128x128xf32, #tpu.memory_space<vmem>>, vector<128x128xf32>
    %c0_14 = arith.constant 0 : index
    %c0_15 = arith.constant 0 : index
    %23 = vector.load %arg7[%c0_14, %c0_15] : memref<1x128xf32, #tpu.memory_space<vmem>>, vector<1x128xf32>
    %cst_16 = arith.constant dense<0.000000e+00> : vector<128x128xf32>
    %24 = tpu.matmul %21, %22, %cst_16 {dimension_numbers = #tpu.dot_dimension_numbers<[1], [0], [0], [1], [0, 0, 1, 1], [], []>} : vector<128x128xf32>, vector<128x128xf32>, vector<128x128xf32> -> vector<128x128xf32>
    %25 = vector.broadcast %23 : vector<1x128xf32> to vector<128x128xf32>
    %26 = arith.addf %24, %25 : vector<128x128xf32>
    %c64_i32_17 = arith.constant 64 : i32
    %27 = tpu.dynamic_rotate %26 by %c64_i32_17 dim 1 : vector<128x128xf32>, i32 -> vector<128x128xf32>
    %28 = arith.maximumf %26, %27 : vector<128x128xf32>
    %29 = arith.minimumf %26, %27 : vector<128x128xf32>
    %30 = arith.select %9, %28, %29 : vector<128x128xi1>, vector<128x128xf32>
    %c0_18 = arith.constant 0 : index
    %c0_19 = arith.constant 0 : index
    %31 = vector.load %arg8[%c0_18, %c0_19] : memref<128x8xf32, #tpu.memory_space<vmem>>, vector<128x8xf32>
    %c0_20 = arith.constant 0 : index
    %c0_21 = arith.constant 0 : index
    %32 = vector.load %arg9[%c0_20, %c0_21] : memref<1x8xf32, #tpu.memory_space<vmem>>, vector<1x8xf32>
    %cst_22 = arith.constant dense<0.000000e+00> : vector<128x8xf32>
    %33 = tpu.matmul %30, %31, %cst_22 {dimension_numbers = #tpu.dot_dimension_numbers<[1], [0], [0], [1], [0, 0, 1, 1], [], []>} : vector<128x128xf32>, vector<128x8xf32>, vector<128x8xf32> -> vector<128x8xf32>
    %34 = vector.broadcast %32 : vector<1x8xf32> to vector<128x8xf32>
    %35 = arith.addf %33, %34 : vector<128x8xf32>
    %c0_23 = arith.constant 0 : index
    %c0_24 = arith.constant 0 : index
    %36 = vector.load %arg10[%c0_23, %c0_24] : memref<128x8xf32, #tpu.memory_space<vmem>>, vector<128x8xf32>
    tpu.vector_store %arg10[%c0_23, %c0_24], %35 {strides = array<i32>} : memref<128x8xf32, #tpu.memory_space<vmem>>, vector<128x8xf32>,
    return
  }
  func.func @transform_0(%arg0: i32) -> (i32, i32) {
    %c0_i32 = arith.constant 0 : i32
    %c0_i32_0 = arith.constant 0 : i32
    return %arg0, %c0_i32 : i32, i32
  }
  func.func @transform_1(%arg0: i32) -> (i32, i32) {
    %c0_i32 = arith.constant 0 : i32
    %c0_i32_0 = arith.constant 0 : i32
    %c0_i32_1 = arith.constant 0 : i32
    return %c0_i32, %c0_i32_0 : i32, i32
  }
  func.func @transform_2(%arg0: i32) -> (i32, i32) {
    %c0_i32 = arith.constant 0 : i32
    %c0_i32_0 = arith.constant 0 : i32
    %c0_i32_1 = arith.constant 0 : i32
    return %c0_i32, %c0_i32_0 : i32, i32
  }
  func.func @transform_3(%arg0: i32) -> (i32, i32) {
    %c0_i32 = arith.constant 0 : i32
    %c0_i32_0 = arith.constant 0 : i32
    %c0_i32_1 = arith.constant 0 : i32
    return %c0_i32, %c0_i32_0 : i32, i32
  }
  func.func @transform_4(%arg0: i32) -> (i32, i32) {
    %c0_i32 = arith.constant 0 : i32
    %c0_i32_0 = arith.constant 0 : i32
    %c0_i32_1 = arith.constant 0 : i32
    return %c0_i32, %c0_i32_0 : i32, i32
  }
  func.func @transform_5(%arg0: i32) -> (i32, i32) {
    %c0_i32 = arith.constant 0 : i32
    %c0_i32_0 = arith.constant 0 : i32
    %c0_i32_1 = arith.constant 0 : i32
    return %c0_i32, %c0_i32_0 : i32, i32
  }
  func.func @transform_6(%arg0: i32) -> (i32, i32) {
    %c0_i32 = arith.constant 0 : i32
    %c0_i32_0 = arith.constant 0 : i32
    %c0_i32_1 = arith.constant 0 : i32
    return %c0_i32, %c0_i32_0 : i32, i32
  }
  func.func @transform_7(%arg0: i32) -> (i32, i32) {
    %c0_i32 = arith.constant 0 : i32
    %c0_i32_0 = arith.constant 0 : i32
    %c0_i32_1 = arith.constant 0 : i32
    return %c0_i32, %c0_i32_0 : i32, i32
  }
  func.func @transform_8(%arg0: i32) -> (i32, i32) {
    %c0_i32 = arith.constant 0 : i32
    %c0_i32_0 = arith.constant 0 : i32
    %c0_i32_1 = arith.constant 0 : i32
    return %c0_i32, %c0_i32_0 : i32, i32
  }
  func.func @transform_9(%arg0: i32) -> (i32, i32) {
    %c0_i32 = arith.constant 0 : i32
    %c0_i32_0 = arith.constant 0 : i32
    return %arg0, %c0_i32 : i32, i32
  }
}

</mosaic_0001>

<llo_original>
// kernel: tpu_custom_call.1
$region0: #{tpu_custom_call.1}
  #allocation0 [shape = 'u32[]', space=smem, size = 0x4, offset = 0x4, fixed_abs, tag = 'smem constant byte address 0x4 - core index']
  #allocation1 [shape = 'u32[72,128]{1,0:T(1,128)}', space=vmem, size = 0x9000, scoped, tag = 'internal scratch']
  %s0 = inlined_call_operand.vmem [shape: f32[128,64], index: 0, kind: input, shape index: {}]
  %s1 = inlined_call_operand.vmem [shape: f32[64,128], index: 1, kind: input, shape index: {}]
  %s2 = inlined_call_operand.vmem [shape: f32[1,128], index: 2, kind: input, shape index: {}]
  %s3 = inlined_call_operand.vmem [shape: f32[128,128], index: 3, kind: input, shape index: {}]
  %s4 = inlined_call_operand.vmem [shape: f32[1,128], index: 4, kind: input, shape index: {}]
  %s5 = inlined_call_operand.vmem [shape: f32[128,128], index: 5, kind: input, shape index: {}]
  %s6 = inlined_call_operand.vmem [shape: f32[1,128], index: 6, kind: input, shape index: {}]
  %s7 = inlined_call_operand.vmem [shape: f32[128,8], index: 7, kind: input, shape index: {}]
  %s8 = inlined_call_operand.vmem [shape: f32[1,8], index: 8, kind: input, shape index: {}]
  %s9 = inlined_call_operand.vmem [shape: f32[128,8], index: 9, kind: output, shape index: {}]
  %s10 = sld [smem:[#allocation0]]
  $region46: #{tpu_custom_call.1} parent=0
    _
  %s12 = ssub.s32 1, %s10
  %s13 = scalar_select 0, %s12, %s10
  // Predicated region
  $region2: #{tpu_custom_call.1} parent=0 // pred_check
    _
  $region3: #{tpu_custom_call.1} parent=0 // pred_check_branch
    %15 = sbr.rel (0) target = $region5
  $region4: #{tpu_custom_call.1} parent=0 // pred_region
    _
  $region5: #{tpu_custom_call.1} parent=0 // pred_fallthru
    _
  // Predicated region
  $region6: #{tpu_custom_call.1} parent=0 // pred_check
    _
  $region7: #{tpu_custom_call.1} parent=0 // pred_check_branch
    %17 = sbr.rel (0) target = $region9
  $region8: #{tpu_custom_call.1} parent=0 // pred_region
    _
  $region9: #{tpu_custom_call.1} parent=0 // pred_fallthru
    _
  // Predicated region
  $region10: #{tpu_custom_call.1} parent=0 // pred_check
    _
  $region11: #{tpu_custom_call.1} parent=0 // pred_check_branch
    %19 = sbr.rel (0) target = $region13
  $region12: #{tpu_custom_call.1} parent=0 // pred_region
    _
  $region13: #{tpu_custom_call.1} parent=0 // pred_fallthru
    _
  // Predicated region
  $region14: #{tpu_custom_call.1} parent=0 // pred_check
    _
  $region15: #{tpu_custom_call.1} parent=0 // pred_check_branch
    %21 = sbr.rel (0) target = $region17
  $region16: #{tpu_custom_call.1} parent=0 // pred_region
    _
  $region17: #{tpu_custom_call.1} parent=0 // pred_fallthru
    _
  // Predicated region
  $region18: #{tpu_custom_call.1} parent=0 // pred_check
    _
  $region19: #{tpu_custom_call.1} parent=0 // pred_check_branch
    %23 = sbr.rel (0) target = $region21
  $region20: #{tpu_custom_call.1} parent=0 // pred_region
    _
  $region21: #{tpu_custom_call.1} parent=0 // pred_fallthru
    _
  // Predicated region
  $region22: #{tpu_custom_call.1} parent=0 // pred_check
    _
  $region23: #{tpu_custom_call.1} parent=0 // pred_check_branch
    %25 = sbr.rel (0) target = $region25
  $region24: #{tpu_custom_call.1} parent=0 // pred_region
    _
  $region25: #{tpu_custom_call.1} parent=0 // pred_fallthru
    _
  // Predicated region
  $region26: #{tpu_custom_call.1} parent=0 // pred_check
    _
  $region27: #{tpu_custom_call.1} parent=0 // pred_check_branch
    %27 = sbr.rel (0) target = $region29
  $region28: #{tpu_custom_call.1} parent=0 // pred_region
    _
  $region29: #{tpu_custom_call.1} parent=0 // pred_fallthru
    _
  // Predicated region
  $region30: #{tpu_custom_call.1} parent=0 // pred_check
    _
  $region31: #{tpu_custom_call.1} parent=0 // pred_check_branch
    %29 = sbr.rel (0) target = $region33
  $region32: #{tpu_custom_call.1} parent=0 // pred_region
    _
  $region33: #{tpu_custom_call.1} parent=0 // pred_fallthru
    _
  // Predicated region
  $region34: #{tpu_custom_call.1} parent=0 // pred_check
    _
  $region35: #{tpu_custom_call.1} parent=0 // pred_check_branch
    %31 = sbr.rel (0) target = $region37
  $region36: #{tpu_custom_call.1} parent=0 // pred_region
    _
  $region37: #{tpu_custom_call.1} parent=0 // pred_fallthru
    _
  %v32 = vld [vmem:[%s0] sm:$0xff]
  %v33 = vld [vmem:[%s0 + $0x8] sm:$0xff]
  %v34 = vld [vmem:[%s0 + $0x10] sm:$0xff]
  %v35 = vld [vmem:[%s0 + $0x18] sm:$0xff]
  %v36 = vld [vmem:[%s0 + $0x20] sm:$0xff]
  %v37 = vld [vmem:[%s0 + $0x28] sm:$0xff]
  %v38 = vld [vmem:[%s0 + $0x30] sm:$0xff]
  %v39 = vld [vmem:[%s0 + $0x38] sm:$0xff]
  %v40 = vld [vmem:[%s0 + $0x40] sm:$0xff]
  %v41 = vld [vmem:[%s0 + $0x48] sm:$0xff]
  %v42 = vld [vmem:[%s0 + $0x50] sm:$0xff]
  %v43 = vld [vmem:[%s0 + $0x58] sm:$0xff]
  %v44 = vld [vmem:[%s0 + $0x60] sm:$0xff]
  %v45 = vld [vmem:[%s0 + $0x68] sm:$0xff]
  %v46 = vld [vmem:[%s0 + $0x70] sm:$0xff]
  %v47 = vld [vmem:[%s0 + $0x78] sm:$0xff]
  %v48 = vld [vmem:[%s1] sm:$0xff]
  %v49 = vld [vmem:[%s1 + $0x8] sm:$0xff]
  %v50 = vld [vmem:[%s1 + $0x10] sm:$0xff]
  %v51 = vld [vmem:[%s1 + $0x18] sm:$0xff]
  %v52 = vld [vmem:[%s1 + $0x20] sm:$0xff]
  %v53 = vld [vmem:[%s1 + $0x28] sm:$0xff]
  %v54 = vld [vmem:[%s1 + $0x30] sm:$0xff]
  %v55 = vld [vmem:[%s1 + $0x38] sm:$0xff]
  %v56 = vld [vmem:[%s2] sm:$0x1]
  %v58 = vperm.slane %v56, 0
  %vm60 = vcmask 523264
  %v62 = vsel %vm60, %v32, 0
  %v65 = vsel %vm60, %v33, 0
  %v68 = vsel %vm60, %v34, 0
  %v71 = vsel %vm60, %v35, 0
  %v74 = vsel %vm60, %v36, 0
  %v77 = vsel %vm60, %v37, 0
  %v80 = vsel %vm60, %v38, 0
  %v83 = vsel %vm60, %v39, 0
  %v86 = vsel %vm60, %v40, 0
  %v89 = vsel %vm60, %v41, 0
  %v92 = vsel %vm60, %v42, 0
  %v95 = vsel %vm60, %v43, 0
  %v98 = vsel %vm60, %v44, 0
  %v101 = vsel %vm60, %v45, 0
  %v104 = vsel %vm60, %v46, 0
  %v107 = vsel %vm60, %v47, 0
  %109 = vmatpush.msra.mxu0 0.0
  %110 = vmatpush.msra.mxu0 0.0
  %111 = vmatpush.msra.mxu0 0.0
  %112 = vmatpush.msra.mxu0 0.0
  %113 = vmatpush.msra.mxu0 0.0
  %114 = vmatpush.msra.mxu0 0.0
  %115 = vmatpush.msra.mxu0 0.0
  %116 = vmatpush.msra.mxu0 0.0
  %117 = vmatpush.msra.mxu0 %v55
  %118 = vmatpush.msra.mxu0 %v54
  %119 = vmatpush.msra.mxu0 %v53
  %120 = vmatpush.msra.mxu0 %v52
  %121 = vmatpush.msra.mxu0 %v51
  %122 = vmatpush.msra.mxu0 %v50
  %123 = vmatpush.msra.mxu0 %v49
  %124 = vmatpush.msra.mxu0 %v48
  %125 = vmatmul.f32.gmra.mxu0 %v62
  %v126 = vpop.f32.mrf.mxu0
  %v127 = vadd.f32 %v58, %v126
  %128 = vmatmul.f32.gmra.mxu0 %v65
  %v129 = vpop.f32.mrf.mxu0
  %v130 = vadd.f32 %v58, %v129
  %131 = vmatmul.f32.gmra.mxu0 %v68
  %v132 = vpop.f32.mrf.mxu0
  %v133 = vadd.f32 %v58, %v132
  %134 = vmatmul.f32.gmra.mxu0 %v71
  %v135 = vpop.f32.mrf.mxu0
  %v136 = vadd.f32 %v58, %v135
  %137 = vmatmul.f32.gmra.mxu0 %v74
  %v138 = vpop.f32.mrf.mxu0
  %v139 = vadd.f32 %v58, %v138
  %140 = vmatmul.f32.gmra.mxu0 %v77
  %v141 = vpop.f32.mrf.mxu0
  %v142 = vadd.f32 %v58, %v141
  %143 = vmatmul.f32.gmra.mxu0 %v80
  %v144 = vpop.f32.mrf.mxu0
  %v145 = vadd.f32 %v58, %v144
  %146 = vmatmul.f32.gmra.mxu0 %v83
  %v147 = vpop.f32.mrf.mxu0
  %v148 = vadd.f32 %v58, %v147
  %149 = vmatmul.f32.gmra.mxu0 %v86
  %v150 = vpop.f32.mrf.mxu0
  %v151 = vadd.f32 %v58, %v150
  %152 = vmatmul.f32.gmra.mxu0 %v89
  %v153 = vpop.f32.mrf.mxu0
  %v154 = vadd.f32 %v58, %v153
  %155 = vmatmul.f32.gmra.mxu0 %v92
  %v156 = vpop.f32.mrf.mxu0
  %v157 = vadd.f32 %v58, %v156
  %158 = vmatmul.f32.gmra.mxu0 %v95
  %v159 = vpop.f32.mrf.mxu0
  %v160 = vadd.f32 %v58, %v159
  %161 = vmatmul.f32.gmra.mxu0 %v98
  %v162 = vpop.f32.mrf.mxu0
  %v163 = vadd.f32 %v58, %v162
  %164 = vmatmul.f32.gmra.mxu0 %v101
  %v165 = vpop.f32.mrf.mxu0
  %v166 = vadd.f32 %v58, %v165
  %167 = vmatmul.f32.gmra.mxu0 %v104
  %v168 = vpop.f32.mrf.mxu0
  %v169 = vadd.f32 %v58, %v168
  %170 = vmatmul.f32.gmra.mxu0 %v107
  %v171 = vpop.f32.mrf.mxu0
  %v172 = vadd.f32 %v58, %v171
  %173 = vdwg.mxu0
  %174 = vrot.lane.b32.xlu0 %v127, 64
  %v175 = vpop.permute.xlu0 %174
  %176 = vrot.lane.b32.xlu0 %v130, 64
  %v177 = vpop.permute.xlu0 %176
  %178 = vrot.lane.b32.xlu0 %v133, 64
  %v179 = vpop.permute.xlu0 %178
  %180 = vrot.lane.b32.xlu0 %v136, 64
  %v181 = vpop.permute.xlu0 %180
  %182 = vrot.lane.b32.xlu0 %v139, 64
  %v183 = vpop.permute.xlu0 %182
  %184 = vrot.lane.b32.xlu0 %v142, 64
  %v185 = vpop.permute.xlu0 %184
  %186 = vrot.lane.b32.xlu0 %v145, 64
  %v187 = vpop.permute.xlu0 %186
  %188 = vrot.lane.b32.xlu0 %v148, 64
  %v189 = vpop.permute.xlu0 %188
  %190 = vrot.lane.b32.xlu0 %v151, 64
  %v191 = vpop.permute.xlu0 %190
  %192 = vrot.lane.b32.xlu0 %v154, 64
  %v193 = vpop.permute.xlu0 %192
  %194 = vrot.lane.b32.xlu0 %v157, 64
  %v195 = vpop.permute.xlu0 %194
  %196 = vrot.lane.b32.xlu0 %v160, 64
  %v197 = vpop.permute.xlu0 %196
  %198 = vrot.lane.b32.xlu0 %v163, 64
  %v199 = vpop.permute.xlu0 %198
  %200 = vrot.lane.b32.xlu0 %v166, 64
  %v201 = vpop.permute.xlu0 %200
  %202 = vrot.lane.b32.xlu0 %v169, 64
  %v203 = vpop.permute.xlu0 %202
  %204 = vrot.lane.b32.xlu0 %v172, 64
  %v205 = vpop.permute.xlu0 %204
  %v206 = vlaneseq
  %v207 = vand.u32 %v206, 127
  %vm208 = vcmp.lt.s32.totalorder %v207, 64
  %v209 = vmax.f32 %v127, %v175
  %v210 = vmax.f32 %v130, %v177
  %v211 = vmax.f32 %v133, %v179
  %v212 = vmax.f32 %v136, %v181
  %v213 = vmax.f32 %v139, %v183
  %v214 = vmax.f32 %v142, %v185
  %v215 = vmax.f32 %v145, %v187
  %v216 = vmax.f32 %v148, %v189
  %v217 = vmax.f32 %v151, %v191
  %v218 = vmax.f32 %v154, %v193
  %v219 = vmax.f32 %v157, %v195
  %v220 = vmax.f32 %v160, %v197
  %v221 = vmax.f32 %v163, %v199
  %v222 = vmax.f32 %v166, %v201
  %v223 = vmax.f32 %v169, %v203
  %v224 = vmax.f32 %v172, %v205
  %v225 = vmin.f32 %v127, %v175
  %v226 = vmin.f32 %v130, %v177
  %v227 = vmin.f32 %v133, %v179
  %v228 = vmin.f32 %v136, %v181
  %v229 = vmin.f32 %v139, %v183
  %v230 = vmin.f32 %v142, %v185
  %v231 = vmin.f32 %v145, %v187
  %v232 = vmin.f32 %v148, %v189
  %v233 = vmin.f32 %v151, %v191
  %v234 = vmin.f32 %v154, %v193
  %v235 = vmin.f32 %v157, %v195
  %v236 = vmin.f32 %v160, %v197
  %v237 = vmin.f32 %v163, %v199
  %v238 = vmin.f32 %v166, %v201
  %v239 = vmin.f32 %v169, %v203
  %v240 = vmin.f32 %v172, %v205
  %v241 = vsel %vm208, %v209, %v225
  %v242 = vsel %vm208, %v210, %v226
  %v243 = vsel %vm208, %v211, %v227
  %v244 = vsel %vm208, %v212, %v228
  %v245 = vsel %vm208, %v213, %v229
  %v246 = vsel %vm208, %v214, %v230
  %v247 = vsel %vm208, %v215, %v231
  %v248 = vsel %vm208, %v216, %v232
  %v249 = vsel %vm208, %v217, %v233
  %v250 = vsel %vm208, %v218, %v234
  %v251 = vsel %vm208, %v219, %v235
  %v252 = vsel %vm208, %v220, %v236
  %v253 = vsel %vm208, %v221, %v237
  %v254 = vsel %vm208, %v222, %v238
  %v255 = vsel %vm208, %v223, %v239
  %v256 = vsel %vm208, %v224, %v240
  %v257 = vld [vmem:[%s3] sm:$0xff]
  %v258 = vld [vmem:[%s3 + $0x8] sm:$0xff]
  %v259 = vld [vmem:[%s3 + $0x10] sm:$0xff]
  %v260 = vld [vmem:[%s3 + $0x18] sm:$0xff]
  %v261 = vld [vmem:[%s3 + $0x20] sm:$0xff]
  %v262 = vld [vmem:[%s3 + $0x28] sm:$0xff]
  %v263 = vld [vmem:[%s3 + $0x30] sm:$0xff]
  %v264 = vld [vmem:[%s3 + $0x38] sm:$0xff]
  %v265 = vld [vmem:[%s3 + $0x40] sm:$0xff]
  %v266 = vld [vmem:[%s3 + $0x48] sm:$0xff]
  %v267 = vld [vmem:[%s3 + $0x50] sm:$0xff]
  %v268 = vld [vmem:[%s3 + $0x58] sm:$0xff]
  %v269 = vld [vmem:[%s3 + $0x60] sm:$0xff]
  %v270 = vld [vmem:[%s3 + $0x68] sm:$0xff]
  %v271 = vld [vmem:[%s3 + $0x70] sm:$0xff]
  %v272 = vld [vmem:[%s3 + $0x78] sm:$0xff]
  %v273 = vld [vmem:[%s4] sm:$0x1]
  %v275 = vperm.slane %v273, 0
  %277 = vmatpush.msra.mxu0 %v272
  %278 = vmatpush.msra.mxu0 %v271
  %279 = vmatpush.msra.mxu0 %v270
  %280 = vmatpush.msra.mxu0 %v269
  %281 = vmatpush.msra.mxu0 %v268
  %282 = vmatpush.msra.mxu0 %v267
  %283 = vmatpush.msra.mxu0 %v266
  %284 = vmatpush.msra.mxu0 %v265
  %285 = vmatpush.msra.mxu0 %v264
  %286 = vmatpush.msra.mxu0 %v263
  %287 = vmatpush.msra.mxu0 %v262
  %288 = vmatpush.msra.mxu0 %v261
  %289 = vmatpush.msra.mxu0 %v260
  %290 = vmatpush.msra.mxu0 %v259
  %291 = vmatpush.msra.mxu0 %v258
  %292 = vmatpush.msra.mxu0 %v257
  %293 = vmatmul.f32.gmra.mxu0 %v241
  %v294 = vpop.f32.mrf.mxu0
  %v295 = vadd.f32 %v275, %v294
  %296 = vmatmul.f32.gmra.mxu0 %v242
  %v297 = vpop.f32.mrf.mxu0
  %v298 = vadd.f32 %v275, %v297
  %299 = vmatmul.f32.gmra.mxu0 %v243
  %v300 = vpop.f32.mrf.mxu0
  %v301 = vadd.f32 %v275, %v300
  %302 = vmatmul.f32.gmra.mxu0 %v244
  %v303 = vpop.f32.mrf.mxu0
  %v304 = vadd.f32 %v275, %v303
  %305 = vmatmul.f32.gmra.mxu0 %v245
  %v306 = vpop.f32.mrf.mxu0
  %v307 = vadd.f32 %v275, %v306
  %308 = vmatmul.f32.gmra.mxu0 %v246
  %v309 = vpop.f32.mrf.mxu0
  %v310 = vadd.f32 %v275, %v309
  %311 = vmatmul.f32.gmra.mxu0 %v247
  %v312 = vpop.f32.mrf.mxu0
  %v313 = vadd.f32 %v275, %v312
  %314 = vmatmul.f32.gmra.mxu0 %v248
  %v315 = vpop.f32.mrf.mxu0
  %v316 = vadd.f32 %v275, %v315
  %317 = vmatmul.f32.gmra.mxu0 %v249
  %v318 = vpop.f32.mrf.mxu0
  %v319 = vadd.f32 %v275, %v318
  %320 = vmatmul.f32.gmra.mxu0 %v250
  %v321 = vpop.f32.mrf.mxu0
  %v322 = vadd.f32 %v275, %v321
  %323 = vmatmul.f32.gmra.mxu0 %v251
  %v324 = vpop.f32.mrf.mxu0
  %v325 = vadd.f32 %v275, %v324
  %326 = vmatmul.f32.gmra.mxu0 %v252
  %v327 = vpop.f32.mrf.mxu0
  %v328 = vadd.f32 %v275, %v327
  %329 = vmatmul.f32.gmra.mxu0 %v253
  %v330 = vpop.f32.mrf.mxu0
  %v331 = vadd.f32 %v275, %v330
  %332 = vmatmul.f32.gmra.mxu0 %v254
  %v333 = vpop.f32.mrf.mxu0
  %v334 = vadd.f32 %v275, %v333
  %335 = vmatmul.f32.gmra.mxu0 %v255
  %v336 = vpop.f32.mrf.mxu0
  %v337 = vadd.f32 %v275, %v336
  %338 = vmatmul.f32.gmra.mxu0 %v256
  %v339 = vpop.f32.mrf.mxu0
  %v340 = vadd.f32 %v275, %v339
  %341 = vdwg.mxu0
  %342 = vrot.lane.b32.xlu0 %v295, 64
  %v343 = vpop.permute.xlu0 %342
  %344 = vrot.lane.b32.xlu0 %v298, 64
  %v345 = vpop.permute.xlu0 %344
  %346 = vrot.lane.b32.xlu0 %v301, 64
  %v347 = vpop.permute.xlu0 %346
  %348 = vrot.lane.b32.xlu0 %v304, 64
  %v349 = vpop.permute.xlu0 %348
  %350 = vrot.lane.b32.xlu0 %v307, 64
  %v351 = vpop.permute.xlu0 %350
  %352 = vrot.lane.b32.xlu0 %v310, 64
  %v353 = vpop.permute.xlu0 %352
  %354 = vrot.lane.b32.xlu0 %v313, 64
  %v355 = vpop.permute.xlu0 %354
  %356 = vrot.lane.b32.xlu0 %v316, 64
  %v357 = vpop.permute.xlu0 %356
  %358 = vrot.lane.b32.xlu0 %v319, 64
  %v359 = vpop.permute.xlu0 %358
  %360 = vrot.lane.b32.xlu0 %v322, 64
  %v361 = vpop.permute.xlu0 %360
  %362 = vrot.lane.b32.xlu0 %v325, 64
  %v363 = vpop.permute.xlu0 %362
  %364 = vrot.lane.b32.xlu0 %v328, 64
  %v365 = vpop.permute.xlu0 %364
  %366 = vrot.lane.b32.xlu0 %v331, 64
  %v367 = vpop.permute.xlu0 %366
  %368 = vrot.lane.b32.xlu0 %v334, 64
  %v369 = vpop.permute.xlu0 %368
  %370 = vrot.lane.b32.xlu0 %v337, 64
  %v371 = vpop.permute.xlu0 %370
  %372 = vrot.lane.b32.xlu0 %v340, 64
  %v373 = vpop.permute.xlu0 %372
  %v374 = vmax.f32 %v295, %v343
  %v375 = vmax.f32 %v298, %v345
  %v376 = vmax.f32 %v301, %v347
  %v377 = vmax.f32 %v304, %v349
  %v378 = vmax.f32 %v307, %v351
  %v379 = vmax.f32 %v310, %v353
  %v380 = vmax.f32 %v313, %v355
  %v381 = vmax.f32 %v316, %v357
  %v382 = vmax.f32 %v319, %v359
  %v383 = vmax.f32 %v322, %v361
  %v384 = vmax.f32 %v325, %v363
  %v385 = vmax.f32 %v328, %v365
  %v386 = vmax.f32 %v331, %v367
  %v387 = vmax.f32 %v334, %v369
  %v388 = vmax.f32 %v337, %v371
  %v389 = vmax.f32 %v340, %v373
  %v390 = vmin.f32 %v295, %v343
  %v391 = vmin.f32 %v298, %v345
  %v392 = vmin.f32 %v301, %v347
  %v393 = vmin.f32 %v304, %v349
  %v394 = vmin.f32 %v307, %v351
  %v395 = vmin.f32 %v310, %v353
  %v396 = vmin.f32 %v313, %v355
  %v397 = vmin.f32 %v316, %v357
  %v398 = vmin.f32 %v319, %v359
  %v399 = vmin.f32 %v322, %v361
  %v400 = vmin.f32 %v325, %v363
  %v401 = vmin.f32 %v328, %v365
  %v402 = vmin.f32 %v331, %v367
  %v403 = vmin.f32 %v334, %v369
  %v404 = vmin.f32 %v337, %v371
  %v405 = vmin.f32 %v340, %v373
  %v406 = vsel %vm208, %v374, %v390
  %v407 = vsel %vm208, %v375, %v391
  %v408 = vsel %vm208, %v376, %v392
  %v409 = vsel %vm208, %v377, %v393
  %v410 = vsel %vm208, %v378, %v394
  %v411 = vsel %vm208, %v379, %v395
  %v412 = vsel %vm208, %v380, %v396
  %v413 = vsel %vm208, %v381, %v397
  %v414 = vsel %vm208, %v382, %v398
  %v415 = vsel %vm208, %v383, %v399
  %v416 = vsel %vm208, %v384, %v400
  %v417 = vsel %vm208, %v385, %v401
  %v418 = vsel %vm208, %v386, %v402
  %v419 = vsel %vm208, %v387, %v403
  %v420 = vsel %vm208, %v388, %v404
  %v421 = vsel %vm208, %v389, %v405
  %v422 = vld [vmem:[%s5] sm:$0xff]
  %v423 = vld [vmem:[%s5 + $0x8] sm:$0xff]
  %v424 = vld [vmem:[%s5 + $0x10] sm:$0xff]
  %v425 = vld [vmem:[%s5 + $0x18] sm:$0xff]
  %v426 = vld [vmem:[%s5 + $0x20] sm:$0xff]
  %v427 = vld [vmem:[%s5 + $0x28] sm:$0xff]
  %v428 = vld [vmem:[%s5 + $0x30] sm:$0xff]
  %v429 = vld [vmem:[%s5 + $0x38] sm:$0xff]
  %v430 = vld [vmem:[%s5 + $0x40] sm:$0xff]
  %v431 = vld [vmem:[%s5 + $0x48] sm:$0xff]
  %v432 = vld [vmem:[%s5 + $0x50] sm:$0xff]
  %v433 = vld [vmem:[%s5 + $0x58] sm:$0xff]
  %v434 = vld [vmem:[%s5 + $0x60] sm:$0xff]
  %v435 = vld [vmem:[%s5 + $0x68] sm:$0xff]
  %v436 = vld [vmem:[%s5 + $0x70] sm:$0xff]
  %v437 = vld [vmem:[%s5 + $0x78] sm:$0xff]
  %v438 = vld [vmem:[%s6] sm:$0x1]
  %v440 = vperm.slane %v438, 0
  %442 = vmatpush.msra.mxu0 %v437
  %443 = vmatpush.msra.mxu0 %v436
  %444 = vmatpush.msra.mxu0 %v435
  %445 = vmatpush.msra.mxu0 %v434
  %446 = vmatpush.msra.mxu0 %v433
  %447 = vmatpush.msra.mxu0 %v432
  %448 = vmatpush.msra.mxu0 %v431
  %449 = vmatpush.msra.mxu0 %v430
  %450 = vmatpush.msra.mxu0 %v429
  %451 = vmatpush.msra.mxu0 %v428
  %452 = vmatpush.msra.mxu0 %v427
  %453 = vmatpush.msra.mxu0 %v426
  %454 = vmatpush.msra.mxu0 %v425
  %455 = vmatpush.msra.mxu0 %v424
  %456 = vmatpush.msra.mxu0 %v423
  %457 = vmatpush.msra.mxu0 %v422
  %458 = vmatmul.f32.gmra.mxu0 %v406
  %v459 = vpop.f32.mrf.mxu0
  %v460 = vadd.f32 %v440, %v459
  %461 = vmatmul.f32.gmra.mxu0 %v407
  %v462 = vpop.f32.mrf.mxu0
  %v463 = vadd.f32 %v440, %v462
  %464 = vmatmul.f32.gmra.mxu0 %v408
  %v465 = vpop.f32.mrf.mxu0
  %v466 = vadd.f32 %v440, %v465
  %467 = vmatmul.f32.gmra.mxu0 %v409
  %v468 = vpop.f32.mrf.mxu0
  %v469 = vadd.f32 %v440, %v468
  %470 = vmatmul.f32.gmra.mxu0 %v410
  %v471 = vpop.f32.mrf.mxu0
  %v472 = vadd.f32 %v440, %v471
  %473 = vmatmul.f32.gmra.mxu0 %v411
  %v474 = vpop.f32.mrf.mxu0
  %v475 = vadd.f32 %v440, %v474
  %476 = vmatmul.f32.gmra.mxu0 %v412
  %v477 = vpop.f32.mrf.mxu0
  %v478 = vadd.f32 %v440, %v477
  %479 = vmatmul.f32.gmra.mxu0 %v413
  %v480 = vpop.f32.mrf.mxu0
  %v481 = vadd.f32 %v440, %v480
  %482 = vmatmul.f32.gmra.mxu0 %v414
  %v483 = vpop.f32.mrf.mxu0
  %v484 = vadd.f32 %v440, %v483
  %485 = vmatmul.f32.gmra.mxu0 %v415
  %v486 = vpop.f32.mrf.mxu0
  %v487 = vadd.f32 %v440, %v486
  %488 = vmatmul.f32.gmra.mxu0 %v416
  %v489 = vpop.f32.mrf.mxu0
  %v490 = vadd.f32 %v440, %v489
  %491 = vmatmul.f32.gmra.mxu0 %v417
  %v492 = vpop.f32.mrf.mxu0
  %v493 = vadd.f32 %v440, %v492
  %494 = vmatmul.f32.gmra.mxu0 %v418
  %v495 = vpop.f32.mrf.mxu0
  %v496 = vadd.f32 %v440, %v495
  %497 = vmatmul.f32.gmra.mxu0 %v419
  %v498 = vpop.f32.mrf.mxu0
  %v499 = vadd.f32 %v440, %v498
  %500 = vmatmul.f32.gmra.mxu0 %v420
  %v501 = vpop.f32.mrf.mxu0
  %v502 = vadd.f32 %v440, %v501
  %503 = vmatmul.f32.gmra.mxu0 %v421
  %v504 = vpop.f32.mrf.mxu0
  %v505 = vadd.f32 %v440, %v504
  %506 = vdwg.mxu0
  %507 = vrot.lane.b32.xlu0 %v460, 64
  %v508 = vpop.permute.xlu0 %507
  %509 = vrot.lane.b32.xlu0 %v463, 64
  %v510 = vpop.permute.xlu0 %509
  %511 = vrot.lane.b32.xlu0 %v466, 64
  %v512 = vpop.permute.xlu0 %511
  %513 = vrot.lane.b32.xlu0 %v469, 64
  %v514 = vpop.permute.xlu0 %513
  %515 = vrot.lane.b32.xlu0 %v472, 64
  %v516 = vpop.permute.xlu0 %515
  %517 = vrot.lane.b32.xlu0 %v475, 64
  %v518 = vpop.permute.xlu0 %517
  %519 = vrot.lane.b32.xlu0 %v478, 64
  %v520 = vpop.permute.xlu0 %519
  %521 = vrot.lane.b32.xlu0 %v481, 64
  %v522 = vpop.permute.xlu0 %521
  %523 = vrot.lane.b32.xlu0 %v484, 64
  %v524 = vpop.permute.xlu0 %523
  %525 = vrot.lane.b32.xlu0 %v487, 64
  %v526 = vpop.permute.xlu0 %525
  %527 = vrot.lane.b32.xlu0 %v490, 64
  %v528 = vpop.permute.xlu0 %527
  %529 = vrot.lane.b32.xlu0 %v493, 64
  %v530 = vpop.permute.xlu0 %529
  %531 = vrot.lane.b32.xlu0 %v496, 64
  %v532 = vpop.permute.xlu0 %531
  %533 = vrot.lane.b32.xlu0 %v499, 64
  %v534 = vpop.permute.xlu0 %533
  %535 = vrot.lane.b32.xlu0 %v502, 64
  %v536 = vpop.permute.xlu0 %535
  %537 = vrot.lane.b32.xlu0 %v505, 64
  %v538 = vpop.permute.xlu0 %537
  %v539 = vmax.f32 %v460, %v508
  %v540 = vmax.f32 %v463, %v510
  %v541 = vmax.f32 %v466, %v512
  %v542 = vmax.f32 %v469, %v514
  %v543 = vmax.f32 %v472, %v516
  %v544 = vmax.f32 %v475, %v518
  %v545 = vmax.f32 %v478, %v520
  %v546 = vmax.f32 %v481, %v522
  %v547 = vmax.f32 %v484, %v524
  %v548 = vmax.f32 %v487, %v526
  %v549 = vmax.f32 %v490, %v528
  %v550 = vmax.f32 %v493, %v530
  %v551 = vmax.f32 %v496, %v532
  %v552 = vmax.f32 %v499, %v534
  %v553 = vmax.f32 %v502, %v536
  %v554 = vmax.f32 %v505, %v538
  %v555 = vmin.f32 %v460, %v508
  %v556 = vmin.f32 %v463, %v510
  %v557 = vmin.f32 %v466, %v512
  %v558 = vmin.f32 %v469, %v514
  %v559 = vmin.f32 %v472, %v516
  %v560 = vmin.f32 %v475, %v518
  %v561 = vmin.f32 %v478, %v520
  %v562 = vmin.f32 %v481, %v522
  %v563 = vmin.f32 %v484, %v524
  %v564 = vmin.f32 %v487, %v526
  %v565 = vmin.f32 %v490, %v528
  %v566 = vmin.f32 %v493, %v530
  %v567 = vmin.f32 %v496, %v532
  %v568 = vmin.f32 %v499, %v534
  %v569 = vmin.f32 %v502, %v536
  %v570 = vmin.f32 %v505, %v538
  %v571 = vsel %vm208, %v539, %v555
  %v572 = vsel %vm208, %v540, %v556
  %v573 = vsel %vm208, %v541, %v557
  %v574 = vsel %vm208, %v542, %v558
  %v575 = vsel %vm208, %v543, %v559
  %v576 = vsel %vm208, %v544, %v560
  %v577 = vsel %vm208, %v545, %v561
  %v578 = vsel %vm208, %v546, %v562
  %v579 = vsel %vm208, %v547, %v563
  %v580 = vsel %vm208, %v548, %v564
  %v581 = vsel %vm208, %v549, %v565
  %v582 = vsel %vm208, %v550, %v566
  %v583 = vsel %vm208, %v551, %v567
  %v584 = vsel %vm208, %v552, %v568
  %v585 = vsel %vm208, %v553, %v569
  %v586 = vsel %vm208, %v554, %v570
  %v587 = vld [vmem:[%s7] sm:$0xff]
  %v588 = vld [vmem:[%s7 + $0x8] sm:$0xff]
  %v589 = vld [vmem:[%s7 + $0x10] sm:$0xff]
  %v590 = vld [vmem:[%s7 + $0x18] sm:$0xff]
  %v591 = vld [vmem:[%s7 + $0x20] sm:$0xff]
  %v592 = vld [vmem:[%s7 + $0x28] sm:$0xff]
  %v593 = vld [vmem:[%s7 + $0x30] sm:$0xff]
  %v594 = vld [vmem:[%s7 + $0x38] sm:$0xff]
  %v595 = vld [vmem:[%s7 + $0x40] sm:$0xff]
  %v596 = vld [vmem:[%s7 + $0x48] sm:$0xff]
  %v597 = vld [vmem:[%s7 + $0x50] sm:$0xff]
  %v598 = vld [vmem:[%s7 + $0x58] sm:$0xff]
  %v599 = vld [vmem:[%s7 + $0x60] sm:$0xff]
  %v600 = vld [vmem:[%s7 + $0x68] sm:$0xff]
  %v601 = vld [vmem:[%s7 + $0x70] sm:$0xff]
  %v602 = vld [vmem:[%s7 + $0x78] sm:$0xff]
  %v603 = vld [vmem:[%s8] sm:$0x1]
  %v605 = vperm.slane %v603, 0
  %607 = vmatpush.msra.mxu0 %v602
  %608 = vmatpush.msra.mxu0 %v601
  %609 = vmatpush.msra.mxu0 %v600
  %610 = vmatpush.msra.mxu0 %v599
  %611 = vmatpush.msra.mxu0 %v598
  %612 = vmatpush.msra.mxu0 %v597
  %613 = vmatpush.msra.mxu0 %v596
  %614 = vmatpush.msra.mxu0 %v595
  %615 = vmatpush.msra.mxu0 %v594
  %616 = vmatpush.msra.mxu0 %v593
  %617 = vmatpush.msra.mxu0 %v592
  %618 = vmatpush.msra.mxu0 %v591
  %619 = vmatpush.msra.mxu0 %v590
  %620 = vmatpush.msra.mxu0 %v589
  %621 = vmatpush.msra.mxu0 %v588
  %622 = vmatpush.msra.mxu0 %v587
  %623 = vmatmul.f32.gmra.mxu0 %v571
  %v624 = vpop.f32.mrf.mxu0
  %v625 = vadd.f32 %v605, %v624
  %626 = vmatmul.f32.gmra.mxu0 %v572
  %v627 = vpop.f32.mrf.mxu0
  %v628 = vadd.f32 %v605, %v627
  %629 = vmatmul.f32.gmra.mxu0 %v573
  %v630 = vpop.f32.mrf.mxu0
  %v631 = vadd.f32 %v605, %v630
  %632 = vmatmul.f32.gmra.mxu0 %v574
  %v633 = vpop.f32.mrf.mxu0
  %v634 = vadd.f32 %v605, %v633
  %635 = vmatmul.f32.gmra.mxu0 %v575
  %v636 = vpop.f32.mrf.mxu0
  %v637 = vadd.f32 %v605, %v636
  %638 = vmatmul.f32.gmra.mxu0 %v576
  %v639 = vpop.f32.mrf.mxu0
  %v640 = vadd.f32 %v605, %v639
  %641 = vmatmul.f32.gmra.mxu0 %v577
  %v642 = vpop.f32.mrf.mxu0
  %v643 = vadd.f32 %v605, %v642
  %644 = vmatmul.f32.gmra.mxu0 %v578
  %v645 = vpop.f32.mrf.mxu0
  %v646 = vadd.f32 %v605, %v645
  %647 = vmatmul.f32.gmra.mxu0 %v579
  %v648 = vpop.f32.mrf.mxu0
  %v649 = vadd.f32 %v605, %v648
  %650 = vmatmul.f32.gmra.mxu0 %v580
  %v651 = vpop.f32.mrf.mxu0
  %v652 = vadd.f32 %v605, %v651
  %653 = vmatmul.f32.gmra.mxu0 %v581
  %v654 = vpop.f32.mrf.mxu0
  %v655 = vadd.f32 %v605, %v654
  %656 = vmatmul.f32.gmra.mxu0 %v582
  %v657 = vpop.f32.mrf.mxu0
  %v658 = vadd.f32 %v605, %v657
  %659 = vmatmul.f32.gmra.mxu0 %v583
  %v660 = vpop.f32.mrf.mxu0
  %v661 = vadd.f32 %v605, %v660
  %662 = vmatmul.f32.gmra.mxu0 %v584
  %v663 = vpop.f32.mrf.mxu0
  %v664 = vadd.f32 %v605, %v663
  %665 = vmatmul.f32.gmra.mxu0 %v585
  %v666 = vpop.f32.mrf.mxu0
  %v667 = vadd.f32 %v605, %v666
  %668 = vmatmul.f32.gmra.mxu0 %v586
  %v669 = vpop.f32.mrf.mxu0
  %v670 = vadd.f32 %v605, %v669
  %671 = vdwg.mxu0
  %vm672 = vcmask 64512
  %673 = vst.msk [vmem:[%s9] sm:$0xff] %vm672, %v625
  %674 = vst.msk [vmem:[%s9 + $0x8] sm:$0xff] %vm672, %v628
  %675 = vst.msk [vmem:[%s9 + $0x10] sm:$0xff] %vm672, %v631
  %676 = vst.msk [vmem:[%s9 + $0x18] sm:$0xff] %vm672, %v634
  %677 = vst.msk [vmem:[%s9 + $0x20] sm:$0xff] %vm672, %v637
  %678 = vst.msk [vmem:[%s9 + $0x28] sm:$0xff] %vm672, %v640
  %679 = vst.msk [vmem:[%s9 + $0x30] sm:$0xff] %vm672, %v643
  %680 = vst.msk [vmem:[%s9 + $0x38] sm:$0xff] %vm672, %v646
  %681 = vst.msk [vmem:[%s9 + $0x40] sm:$0xff] %vm672, %v649
  %682 = vst.msk [vmem:[%s9 + $0x48] sm:$0xff] %vm672, %v652
  %683 = vst.msk [vmem:[%s9 + $0x50] sm:$0xff] %vm672, %v655
  %684 = vst.msk [vmem:[%s9 + $0x58] sm:$0xff] %vm672, %v658
  %685 = vst.msk [vmem:[%s9 + $0x60] sm:$0xff] %vm672, %v661
  %686 = vst.msk [vmem:[%s9 + $0x68] sm:$0xff] %vm672, %v664
  %687 = vst.msk [vmem:[%s9 + $0x70] sm:$0xff] %vm672, %v667
  %688 = vst.msk [vmem:[%s9 + $0x78] sm:$0xff] %vm672, %v670
  // Predicated region
  $region38: #{tpu_custom_call.1} parent=0 // pred_check
    _
  $region39: #{tpu_custom_call.1} parent=0 // pred_check_branch
    %690 = sbr.rel (0) target = $region41
  $region40: #{tpu_custom_call.1} parent=0 // pred_region
    _
  $region41: #{tpu_custom_call.1} parent=0 // pred_fallthru
    _
  // Predicated region
  $region42: #{tpu_custom_call.1} parent=0 // pred_check
    _
  $region43: #{tpu_custom_call.1} parent=0 // pred_check_branch
    %692 = sbr.rel (0) target = $region45
  $region44: #{tpu_custom_call.1} parent=0 // pred_region
    _
  $region45: #{tpu_custom_call.1} parent=0 // pred_fallthru
    _

</llo_original>
